<compile_context>
chip_gen: v7x
topology: tpu7x:2x2x1
jax: 0.10.0
libtpu: 0.0.40
codegen_flags: <defaults>
</compile_context>

<pallas_src>
import functools

import jax
import jax.numpy as jnp
from jax.experimental import pallas as pl
from jax.experimental.pallas import tpu as pltpu

_SUBLANE_PAD = 16   # bf16 packs 2 rows per sublane -> native (16, 128) tile
_LANE_PAD = 128


def _round_up(n, m):
    return max(m, ((n + m - 1) // m) * m)


# ---------------------------------------------------------------------------
# Kernels
# ---------------------------------------------------------------------------
def _mlp_body(x_f32, w1_ref, b1_ref, w2_ref, b2_ref):
    # x_f32: (M, D) f32  -> cast to bf16 in-kernel (free VPU op)
    x = x_f32.astype(jnp.bfloat16)
    h = jnp.dot(x, w1_ref[...], preferred_element_type=jnp.float32)
    h = jnp.maximum(h + b1_ref[...], 0.0)                 # bias + ReLU on VPU
    o = jnp.dot(h.astype(jnp.bfloat16), w2_ref[...],
                preferred_element_type=jnp.float32)
    return o + b2_ref[...]


def _triplet_kernel(x1_ref, x2_ref, x3_ref, w1_ref, b1_ref, w2_ref, b2_ref,
                    o1_ref, o2_ref, o3_ref):
    bp = x1_ref.shape[0]
    # Stack the three activation blocks in VMEM so each matmul runs once on a
    # (3*B_pad, ...) batch and the shared weights are read from HBM once.
    x = jnp.concatenate([x1_ref[...], x2_ref[...], x3_ref[...]], axis=0)
    o = _mlp_body(x, w1_ref, b1_ref, w2_ref, b2_ref)
    o1_ref[...] = o[:bp]
    o2_ref[...] = o[bp:2 * bp]
    o3_ref[...] = o[2 * bp:3 * bp]


def _single_kernel(x_ref, w1_ref, b1_ref, w2_ref, b2_ref, o_ref):
    o_ref[...] = _mlp_body(x_ref[...], w1_ref, b1_ref, w2_ref, b2_ref)


# ---------------------------------------------------------------------------
# Parameter prep (one-time): bf16 cast + lane padding of the shared weights.
# ---------------------------------------------------------------------------
def init_embedding_params(key, D, H, E):
    k1, k2 = jax.random.split(key)
    w1 = jax.random.normal(k1, (D, H), dtype=jnp.float32) * 0.02
    b1 = jnp.zeros((H,), dtype=jnp.float32)
    w2 = jax.random.normal(k2, (H, E), dtype=jnp.float32) * 0.02
    b2 = jnp.zeros((E,), dtype=jnp.float32)
    return w1, b1, w2, b2


def prepare_params(params):
    """Cast weights to bf16 and pad the output lane dim to 128 ONCE."""
    w1, b1, w2, b2 = params
    D, H = w1.shape
    E = w2.shape[1]
    E_pad = _round_up(E, _LANE_PAD)
    w1_bf = w1.astype(jnp.bfloat16)
    b1_2d = b1.reshape(1, H).astype(jnp.float32)
    w2_bf = jnp.pad(w2, ((0, 0), (0, E_pad - E))).astype(jnp.bfloat16)
    b2_2d = jnp.pad(b2, (0, E_pad - E)).reshape(1, E_pad).astype(jnp.float32)
    return (w1_bf, b1_2d, w2_bf, b2_2d)


def _vmem_spec():
    return pl.BlockSpec(memory_space=pltpu.MemorySpace.VMEM)


def _prep_activation(x, B, D, B_pad):
    x2d = x.reshape(B, D)              # flatten NCHW; stays f32, cast in-kernel
    if B_pad != B:
        x2d = jnp.pad(x2d, ((0, B_pad - B), (0, 0)))
    return x2d


# ---------------------------------------------------------------------------
# Public forward passes (jitted so all wrapper plumbing fuses).
# ---------------------------------------------------------------------------
@functools.partial(jax.jit, static_argnames=("embed_dim",))
def triplet_net_forward(x1, x2, x3, prepped, *, embed_dim):
    """TripletNet.forward: shared embedding applied to x1, x2, x3."""
    w1_bf, b1_2d, w2_bf, b2_2d = prepped
    D, H = w1_bf.shape
    E_pad = w2_bf.shape[1]
    B = x1.shape[0]
    B_pad = _round_up(B, _SUBLANE_PAD)
    M = 3 * B_pad

    xs = [_prep_activation(x, B, D, B_pad) for x in (x1, x2, x3)]

    cost = pl.CostEstimate(
        flops=2 * M * (D * H + H * E_pad),
        transcendentals=0,
        bytes_accessed=(4 * M * D                       # f32 activations in
                        + 2 * (D * H + H * E_pad)       # bf16 weights
                        + 4 * (H + E_pad + M * E_pad)), # f32 biases + outputs
    )

    out_shape = jax.ShapeDtypeStruct((B_pad, E_pad), jnp.float32)
    o1, o2, o3 = pl.pallas_call(
        _triplet_kernel,
        out_shape=(out_shape, out_shape, out_shape),
        in_specs=[_vmem_spec()] * 7,
        out_specs=(_vmem_spec(), _vmem_spec(), _vmem_spec()),
        cost_estimate=cost,
    )(xs[0], xs[1], xs[2], w1_bf, b1_2d, w2_bf, b2_2d)

    return (o1[:B, :embed_dim], o2[:B, :embed_dim], o3[:B, :embed_dim])


@functools.partial(jax.jit, static_argnames=("embed_dim",))
def get_embedding(x, prepped, *, embed_dim):
    """TripletNet.get_embedding: embedding of a single input."""
    w1_bf, b1_2d, w2_bf, b2_2d = prepped
    D, H = w1_bf.shape
    E_pad = w2_bf.shape[1]
    B = x.shape[0]
    B_pad = _round_up(B, _SUBLANE_PAD)

    x2d = _prep_activation(x, B, D, B_pad)

    cost = pl.CostEstimate(
        flops=2 * B_pad * (D * H + H * E_pad),
        transcendentals=0,
        bytes_accessed=(4 * B_pad * D + 2 * (D * H + H * E_pad)
                        + 4 * (H + E_pad + B_pad * E_pad)),
    )

    out = pl.pallas_call(
        _single_kernel,
        out_shape=jax.ShapeDtypeStruct((B_pad, E_pad), jnp.float32),
        in_specs=[_vmem_spec()] * 5,
        out_specs=_vmem_spec(),
        cost_estimate=cost,
    )(x2d, w1_bf, b1_2d, w2_bf, b2_2d)

    return out[:B, :embed_dim]


# ---------------------------------------------------------------------------
if __name__ == "__main__":
    # Small conv-style inputs: NCHW = (2, 4, 16, 16).
    B, C, Himg, Wimg = 2, 4, 16, 16
    D = C * Himg * Wimg      # 1024 flattened features
    HID = 128                # hidden width
    E = 64                   # embedding dim

    key = jax.random.PRNGKey(0)
    kx1, kx2, kx3, kp = jax.random.split(key, 4)
    x1 = jax.random.normal(kx1, (B, C, Himg, Wimg), dtype=jnp.float32)
    x2 = jax.random.normal(kx2, (B, C, Himg, Wimg), dtype=jnp.float32)
    x3 = jax.random.normal(kx3, (B, C, Himg, Wimg), dtype=jnp.float32)

    params = init_embedding_params(kp, D, HID, E)
    prepped = prepare_params(params)          # one-time bf16 cast + pad

    out1, out2, out3 = triplet_net_forward(x1, x2, x3, prepped, embed_dim=E)
    jax.block_until_ready((out1, out2, out3))

    # Pure-JAX f32 reference for the shared embedding (bf16 weights in the
    # kernel => relaxed tolerance).
    def ref_embed(x):
        w1, b1, w2, b2 = params
        h = jnp.maximum(x.reshape(B, D) @ w1 + b1, 0.0)
        return h @ w2 + b2

    assert out1.shape == (B, E) and out2.shape == (B, E) and out3.shape == (B, E)
    assert jnp.allclose(out1, ref_embed(x1), atol=3e-2, rtol=3e-2)
    assert jnp.allclose(out2, ref_embed(x2), atol=3e-2, rtol=3e-2)
    assert jnp.allclose(out3, ref_embed(x3), atol=3e-2, rtol=3e-2)

    # get_embedding path shares the same weights / math.
    e1 = get_embedding(x1, prepped, embed_dim=E)
    jax.block_until_ready(e1)
    assert e1.shape == (B, E)
    assert jnp.allclose(e1, out1, atol=3e-2, rtol=3e-2)

    print("KERNEL_OK")
</pallas_src>

<mosaic_0001>
module attributes {stable_mosaic.version = 11 : i64} {
  func.func @_triplet_kernel(%arg0: memref<16x1024xf32, #tpu.memory_space<vmem>>, %arg1: memref<16x1024xf32, #tpu.memory_space<vmem>>, %arg2: memref<16x1024xf32, #tpu.memory_space<vmem>>, %arg3: memref<1024x128xbf16, #tpu.memory_space<vmem>>, %arg4: memref<1x128xf32, #tpu.memory_space<vmem>>, %arg5: memref<128x128xbf16, #tpu.memory_space<vmem>>, %arg6: memref<1x128xf32, #tpu.memory_space<vmem>>, %arg7: memref<16x128xf32, #tpu.memory_space<vmem>>, %arg8: memref<16x128xf32, #tpu.memory_space<vmem>>, %arg9: memref<16x128xf32, #tpu.memory_space<vmem>>) attributes {dimension_semantics = [], scalar_prefetch = 0 : i64, scratch_operands = 0 : i64, tpu.core_type = #tpu.core_type<tc>} {
    %c0 = arith.constant 0 : index
    %c0_0 = arith.constant 0 : index
    %0 = vector.load %arg0[%c0, %c0_0] : memref<16x1024xf32, #tpu.memory_space<vmem>>, vector<16x1024xf32>
    %c0_1 = arith.constant 0 : index
    %c0_2 = arith.constant 0 : index
    %1 = vector.load %arg1[%c0_1, %c0_2] : memref<16x1024xf32, #tpu.memory_space<vmem>>, vector<16x1024xf32>
    %c0_3 = arith.constant 0 : index
    %c0_4 = arith.constant 0 : index
    %2 = vector.load %arg2[%c0_3, %c0_4] : memref<16x1024xf32, #tpu.memory_space<vmem>>, vector<16x1024xf32>
    %3 = tpu.concatenate %0, %1, %2 in 0 : vector<16x1024xf32>, vector<16x1024xf32>, vector<16x1024xf32> -> vector<48x1024xf32>
    %4 = arith.truncf %3 : vector<48x1024xf32> to vector<48x1024xbf16>
    %c0_5 = arith.constant 0 : index
    %c0_6 = arith.constant 0 : index
    %5 = vector.load %arg3[%c0_5, %c0_6] : memref<1024x128xbf16, #tpu.memory_space<vmem>>, vector<1024x128xbf16>
    %cst = arith.constant dense<0.000000e+00> : vector<48x128xf32>
    %6 = tpu.matmul %4, %5, %cst {dimension_numbers = #tpu.dot_dimension_numbers<[1], [0], [0], [1], [0, 0, 1, 1], [], []>} : vector<48x1024xbf16>, vector<1024x128xbf16>, vector<48x128xf32> -> vector<48x128xf32>
    %c0_7 = arith.constant 0 : index
    %c0_8 = arith.constant 0 : index
    %7 = vector.load %arg4[%c0_7, %c0_8] : memref<1x128xf32, #tpu.memory_space<vmem>>, vector<1x128xf32>
    %8 = vector.broadcast %7 : vector<1x128xf32> to vector<48x128xf32>
    %9 = arith.addf %6, %8 : vector<48x128xf32>
    %cst_9 = arith.constant 0.000000e+00 : f32
    %10 = vector.broadcast %cst_9 : f32 to vector<48x128xf32>
    %11 = arith.maximumf %9, %10 : vector<48x128xf32>
    %12 = arith.truncf %11 : vector<48x128xf32> to vector<48x128xbf16>
    %c0_10 = arith.constant 0 : index
    %c0_11 = arith.constant 0 : index
    %13 = vector.load %arg5[%c0_10, %c0_11] : memref<128x128xbf16, #tpu.memory_space<vmem>>, vector<128x128xbf16>
    %cst_12 = arith.constant dense<0.000000e+00> : vector<48x128xf32>
    %14 = tpu.matmul %12, %13, %cst_12 {dimension_numbers = #tpu.dot_dimension_numbers<[1], [0], [0], [1], [0, 0, 1, 1], [], []>} : vector<48x128xbf16>, vector<128x128xbf16>, vector<48x128xf32> -> vector<48x128xf32>
    %c0_13 = arith.constant 0 : index
    %c0_14 = arith.constant 0 : index
    %15 = vector.load %arg6[%c0_13, %c0_14] : memref<1x128xf32, #tpu.memory_space<vmem>>, vector<1x128xf32>
    %16 = vector.broadcast %15 : vector<1x128xf32> to vector<48x128xf32>
    %17 = arith.addf %14, %16 : vector<48x128xf32>
    %18 = vector.extract_strided_slice %17 {offsets = [0, 0], sizes = [16, 128], strides = [1, 1]} : vector<48x128xf32> to vector<16x128xf32>
    %c0_15 = arith.constant 0 : index
    %c0_16 = arith.constant 0 : index
    %19 = vector.load %arg7[%c0_15, %c0_16] : memref<16x128xf32, #tpu.memory_space<vmem>>, vector<16x128xf32>
    tpu.vector_store %arg7[%c0_15, %c0_16], %18 {strides = array<i32>} : memref<16x128xf32, #tpu.memory_space<vmem>>, vector<16x128xf32>,
    %20 = vector.extract_strided_slice %17 {offsets = [16, 0], sizes = [16, 128], strides = [1, 1]} : vector<48x128xf32> to vector<16x128xf32>
    %c0_17 = arith.constant 0 : index
    %c0_18 = arith.constant 0 : index
    %21 = vector.load %arg8[%c0_17, %c0_18] : memref<16x128xf32, #tpu.memory_space<vmem>>, vector<16x128xf32>
    tpu.vector_store %arg8[%c0_17, %c0_18], %20 {strides = array<i32>} : memref<16x128xf32, #tpu.memory_space<vmem>>, vector<16x128xf32>,
    %22 = vector.extract_strided_slice %17 {offsets = [32, 0], sizes = [16, 128], strides = [1, 1]} : vector<48x128xf32> to vector<16x128xf32>
    %c0_19 = arith.constant 0 : index
    %c0_20 = arith.constant 0 : index
    %23 = vector.load %arg9[%c0_19, %c0_20] : memref<16x128xf32, #tpu.memory_space<vmem>>, vector<16x128xf32>
    tpu.vector_store %arg9[%c0_19, %c0_20], %22 {strides = array<i32>} : memref<16x128xf32, #tpu.memory_space<vmem>>, vector<16x128xf32>,
    return
  }
}

</mosaic_0001>

<llo_original>
// kernel: triplet_net_forward.1
$region0: #{triplet_net_forward.1}
  #allocation0 [shape = 'u32[]', space=smem, size = 0x4, offset = 0x4, fixed_abs, tag = 'smem constant byte address 0x4 - core index']
  #allocation1 [shape = 'u32[144,128]{1,0:T(1,128)}', space=vmem, size = 0x12000, scoped, tag = 'internal scratch']
  %s0 = inlined_call_operand.vmem [shape: f32[16,1024], index: 0, kind: input, shape index: {}]
  %s1 = inlined_call_operand.vmem [shape: f32[16,1024], index: 1, kind: input, shape index: {}]
  %s2 = inlined_call_operand.vmem [shape: f32[16,1024], index: 2, kind: input, shape index: {}]
  %s3 = inlined_call_operand.vmem [shape: bf16[1024,128], index: 3, kind: input, shape index: {}]
  %s4 = inlined_call_operand.vmem [shape: f32[1,128], index: 4, kind: input, shape index: {}]
  %s5 = inlined_call_operand.vmem [shape: bf16[128,128], index: 5, kind: input, shape index: {}]
  %s6 = inlined_call_operand.vmem [shape: f32[1,128], index: 6, kind: input, shape index: {}]
  %s7 = inlined_call_operand.vmem [shape: f32[16,128], index: 7, kind: output, shape index: {0}]
  %s8 = inlined_call_operand.vmem [shape: f32[16,128], index: 8, kind: output, shape index: {1}]
  %s9 = inlined_call_operand.vmem [shape: f32[16,128], index: 9, kind: output, shape index: {2}]
  %10 = xla_tuple %s7, %s8, %s9
  %s11 = sld [smem:[#allocation0]]
  $region54: #{triplet_net_forward.1} parent=0
    _
  %s13 = ssub.s32 1, %s11
  %s14 = scalar_select 0, %s13, %s11
  // Predicated region
  $region2: #{triplet_net_forward.1} parent=0 // pred_check
    _
  $region3: #{triplet_net_forward.1} parent=0 // pred_check_branch
    %16 = sbr.rel (0) target = $region5
  $region4: #{triplet_net_forward.1} parent=0 // pred_region
    _
  $region5: #{triplet_net_forward.1} parent=0 // pred_fallthru
    _
  // Predicated region
  $region6: #{triplet_net_forward.1} parent=0 // pred_check
    _
  $region7: #{triplet_net_forward.1} parent=0 // pred_check_branch
    %18 = sbr.rel (0) target = $region9
  $region8: #{triplet_net_forward.1} parent=0 // pred_region
    _
  $region9: #{triplet_net_forward.1} parent=0 // pred_fallthru
    _
  // Predicated region
  $region10: #{triplet_net_forward.1} parent=0 // pred_check
    _
  $region11: #{triplet_net_forward.1} parent=0 // pred_check_branch
    %20 = sbr.rel (0) target = $region13
  $region12: #{triplet_net_forward.1} parent=0 // pred_region
    _
  $region13: #{triplet_net_forward.1} parent=0 // pred_fallthru
    _
  // Predicated region
  $region14: #{triplet_net_forward.1} parent=0 // pred_check
    _
  $region15: #{triplet_net_forward.1} parent=0 // pred_check_branch
    %22 = sbr.rel (0) target = $region17
  $region16: #{triplet_net_forward.1} parent=0 // pred_region
    _
  $region17: #{triplet_net_forward.1} parent=0 // pred_fallthru
    _
  // Predicated region
  $region18: #{triplet_net_forward.1} parent=0 // pred_check
    _
  $region19: #{triplet_net_forward.1} parent=0 // pred_check_branch
    %24 = sbr.rel (0) target = $region21
  $region20: #{triplet_net_forward.1} parent=0 // pred_region
    _
  $region21: #{triplet_net_forward.1} parent=0 // pred_fallthru
    _
  // Predicated region
  $region22: #{triplet_net_forward.1} parent=0 // pred_check
    _
  $region23: #{triplet_net_forward.1} parent=0 // pred_check_branch
    %26 = sbr.rel (0) target = $region25
  $region24: #{triplet_net_forward.1} parent=0 // pred_region
    _
  $region25: #{triplet_net_forward.1} parent=0 // pred_fallthru
    _
  // Predicated region
  $region26: #{triplet_net_forward.1} parent=0 // pred_check
    _
  $region27: #{triplet_net_forward.1} parent=0 // pred_check_branch
    %28 = sbr.rel (0) target = $region29
  $region28: #{triplet_net_forward.1} parent=0 // pred_region
    _
  $region29: #{triplet_net_forward.1} parent=0 // pred_fallthru
    _
  %v30 = vld [vmem:[%s0] sm:$0xff]
  %v31 = vld [vmem:[%s0 + $0x8] sm:$0xff]
  %v32 = vld [vmem:[%s0 + $0x10] sm:$0xff]
  %v33 = vld [vmem:[%s0 + $0x18] sm:$0xff]
  %v34 = vld [vmem:[%s0 + $0x20] sm:$0xff]
  %v35 = vld [vmem:[%s0 + $0x28] sm:$0xff]
  %v36 = vld [vmem:[%s0 + $0x30] sm:$0xff]
  %v37 = vld [vmem:[%s0 + $0x38] sm:$0xff]
  %v38 = vld [vmem:[%s0 + $0x40] sm:$0xff]
  %v39 = vld [vmem:[%s0 + $0x48] sm:$0xff]
  %v40 = vld [vmem:[%s0 + $0x50] sm:$0xff]
  %v41 = vld [vmem:[%s0 + $0x58] sm:$0xff]
  %v42 = vld [vmem:[%s0 + $0x60] sm:$0xff]
  %v43 = vld [vmem:[%s0 + $0x68] sm:$0xff]
  %v44 = vld [vmem:[%s0 + $0x70] sm:$0xff]
  %v45 = vld [vmem:[%s0 + $0x78] sm:$0xff]
  %v46 = vld [vmem:[%s1] sm:$0xff]
  %v47 = vld [vmem:[%s1 + $0x8] sm:$0xff]
  %v48 = vld [vmem:[%s1 + $0x10] sm:$0xff]
  %v49 = vld [vmem:[%s1 + $0x18] sm:$0xff]
  %v50 = vld [vmem:[%s1 + $0x20] sm:$0xff]
  %v51 = vld [vmem:[%s1 + $0x28] sm:$0xff]
  %v52 = vld [vmem:[%s1 + $0x30] sm:$0xff]
  %v53 = vld [vmem:[%s1 + $0x38] sm:$0xff]
  %v54 = vld [vmem:[%s1 + $0x40] sm:$0xff]
  %v55 = vld [vmem:[%s1 + $0x48] sm:$0xff]
  %v56 = vld [vmem:[%s1 + $0x50] sm:$0xff]
  %v57 = vld [vmem:[%s1 + $0x58] sm:$0xff]
  %v58 = vld [vmem:[%s1 + $0x60] sm:$0xff]
  %v59 = vld [vmem:[%s1 + $0x68] sm:$0xff]
  %v60 = vld [vmem:[%s1 + $0x70] sm:$0xff]
  %v61 = vld [vmem:[%s1 + $0x78] sm:$0xff]
  %v62 = vld [vmem:[%s2] sm:$0xff]
  %v63 = vld [vmem:[%s2 + $0x8] sm:$0xff]
  %v64 = vld [vmem:[%s2 + $0x10] sm:$0xff]
  %v65 = vld [vmem:[%s2 + $0x18] sm:$0xff]
  %v66 = vld [vmem:[%s2 + $0x20] sm:$0xff]
  %v67 = vld [vmem:[%s2 + $0x28] sm:$0xff]
  %v68 = vld [vmem:[%s2 + $0x30] sm:$0xff]
  %v69 = vld [vmem:[%s2 + $0x38] sm:$0xff]
  %v70 = vld [vmem:[%s2 + $0x40] sm:$0xff]
  %v71 = vld [vmem:[%s2 + $0x48] sm:$0xff]
  %v72 = vld [vmem:[%s2 + $0x50] sm:$0xff]
  %v73 = vld [vmem:[%s2 + $0x58] sm:$0xff]
  %v74 = vld [vmem:[%s2 + $0x60] sm:$0xff]
  %v75 = vld [vmem:[%s2 + $0x68] sm:$0xff]
  %v76 = vld [vmem:[%s2 + $0x70] sm:$0xff]
  %v77 = vld [vmem:[%s2 + $0x78] sm:$0xff]
  %v78 = vpack.c.bf16 %v38, %v30
  %v79 = vpack.c.bf16 %v39, %v31
  %v80 = vpack.c.bf16 %v40, %v32
  %v81 = vpack.c.bf16 %v41, %v33
  %v82 = vpack.c.bf16 %v42, %v34
  %v83 = vpack.c.bf16 %v43, %v35
  %v84 = vpack.c.bf16 %v44, %v36
  %v85 = vpack.c.bf16 %v45, %v37
  %v86 = vpack.c.bf16 %v54, %v46
  %v87 = vpack.c.bf16 %v55, %v47
  %v88 = vpack.c.bf16 %v56, %v48
  %v89 = vpack.c.bf16 %v57, %v49
  %v90 = vpack.c.bf16 %v58, %v50
  %v91 = vpack.c.bf16 %v59, %v51
  %v92 = vpack.c.bf16 %v60, %v52
  %v93 = vpack.c.bf16 %v61, %v53
  %v94 = vpack.c.bf16 %v70, %v62
  %v95 = vpack.c.bf16 %v71, %v63
  %v96 = vpack.c.bf16 %v72, %v64
  %v97 = vpack.c.bf16 %v73, %v65
  %v98 = vpack.c.bf16 %v74, %v66
  %v99 = vpack.c.bf16 %v75, %v67
  %v100 = vpack.c.bf16 %v76, %v68
  %v101 = vpack.c.bf16 %v77, %v69
  %v102 = vld [vmem:[%s3] sm:$0xf]
  %v103 = vld [vmem:[%s3 + $0x4] sm:$0xf]
  %v104 = vld [vmem:[%s3 + $0x8] sm:$0xf]
  %v105 = vld [vmem:[%s3 + $0xc] sm:$0xf]
  %v106 = vld [vmem:[%s3 + $0x10] sm:$0xf]
  %v107 = vld [vmem:[%s3 + $0x14] sm:$0xf]
  %v108 = vld [vmem:[%s3 + $0x18] sm:$0xf]
  %v109 = vld [vmem:[%s3 + $0x1c] sm:$0xf]
  %v110 = vld [vmem:[%s3 + $0x20] sm:$0xf]
  %v111 = vld [vmem:[%s3 + $0x24] sm:$0xf]
  %v112 = vld [vmem:[%s3 + $0x28] sm:$0xf]
  %v113 = vld [vmem:[%s3 + $0x2c] sm:$0xf]
  %v114 = vld [vmem:[%s3 + $0x30] sm:$0xf]
  %v115 = vld [vmem:[%s3 + $0x34] sm:$0xf]
  %v116 = vld [vmem:[%s3 + $0x38] sm:$0xf]
  %v117 = vld [vmem:[%s3 + $0x3c] sm:$0xf]
  %v118 = vld [vmem:[%s3 + $0x40] sm:$0xf]
  %v119 = vld [vmem:[%s3 + $0x44] sm:$0xf]
  %v120 = vld [vmem:[%s3 + $0x48] sm:$0xf]
  %v121 = vld [vmem:[%s3 + $0x4c] sm:$0xf]
  %v122 = vld [vmem:[%s3 + $0x50] sm:$0xf]
  %v123 = vld [vmem:[%s3 + $0x54] sm:$0xf]
  %v124 = vld [vmem:[%s3 + $0x58] sm:$0xf]
  %v125 = vld [vmem:[%s3 + $0x5c] sm:$0xf]
  %v126 = vld [vmem:[%s3 + $0x60] sm:$0xf]
  %v127 = vld [vmem:[%s3 + $0x64] sm:$0xf]
  %v128 = vld [vmem:[%s3 + $0x68] sm:$0xf]
  %v129 = vld [vmem:[%s3 + $0x6c] sm:$0xf]
  %v130 = vld [vmem:[%s3 + $0x70] sm:$0xf]
  %v131 = vld [vmem:[%s3 + $0x74] sm:$0xf]
  %v132 = vld [vmem:[%s3 + $0x78] sm:$0xf]
  %v133 = vld [vmem:[%s3 + $0x7c] sm:$0xf]
  %v134 = vld [vmem:[%s3 + $0x80] sm:$0xf]
  %v135 = vld [vmem:[%s3 + $0x84] sm:$0xf]
  %v136 = vld [vmem:[%s3 + $0x88] sm:$0xf]
  %v137 = vld [vmem:[%s3 + $0x8c] sm:$0xf]
  %v138 = vld [vmem:[%s3 + $0x90] sm:$0xf]
  %v139 = vld [vmem:[%s3 + $0x94] sm:$0xf]
  %v140 = vld [vmem:[%s3 + $0x98] sm:$0xf]
  %v141 = vld [vmem:[%s3 + $0x9c] sm:$0xf]
  %v142 = vld [vmem:[%s3 + $0xa0] sm:$0xf]
  %v143 = vld [vmem:[%s3 + $0xa4] sm:$0xf]
  %v144 = vld [vmem:[%s3 + $0xa8] sm:$0xf]
  %v145 = vld [vmem:[%s3 + $0xac] sm:$0xf]
  %v146 = vld [vmem:[%s3 + $0xb0] sm:$0xf]
  %v147 = vld [vmem:[%s3 + $0xb4] sm:$0xf]
  %v148 = vld [vmem:[%s3 + $0xb8] sm:$0xf]
  %v149 = vld [vmem:[%s3 + $0xbc] sm:$0xf]
  %v150 = vld [vmem:[%s3 + $0xc0] sm:$0xf]
  %v151 = vld [vmem:[%s3 + $0xc4] sm:$0xf]
  %v152 = vld [vmem:[%s3 + $0xc8] sm:$0xf]
  %v153 = vld [vmem:[%s3 + $0xcc] sm:$0xf]
  %v154 = vld [vmem:[%s3 + $0xd0] sm:$0xf]
  %v155 = vld [vmem:[%s3 + $0xd4] sm:$0xf]
  %v156 = vld [vmem:[%s3 + $0xd8] sm:$0xf]
  %v157 = vld [vmem:[%s3 + $0xdc] sm:$0xf]
  %v158 = vld [vmem:[%s3 + $0xe0] sm:$0xf]
  %v159 = vld [vmem:[%s3 + $0xe4] sm:$0xf]
  %v160 = vld [vmem:[%s3 + $0xe8] sm:$0xf]
  %v161 = vld [vmem:[%s3 + $0xec] sm:$0xf]
  %v162 = vld [vmem:[%s3 + $0xf0] sm:$0xf]
  %v163 = vld [vmem:[%s3 + $0xf4] sm:$0xf]
  %v164 = vld [vmem:[%s3 + $0xf8] sm:$0xf]
  %v165 = vld [vmem:[%s3 + $0xfc] sm:$0xf]
  %v166 = vld [vmem:[%s3 + $0x100] sm:$0xf]
  %v167 = vld [vmem:[%s3 + $0x104] sm:$0xf]
  %v168 = vld [vmem:[%s3 + $0x108] sm:$0xf]
  %v169 = vld [vmem:[%s3 + $0x10c] sm:$0xf]
  %v170 = vld [vmem:[%s3 + $0x110] sm:$0xf]
  %v171 = vld [vmem:[%s3 + $0x114] sm:$0xf]
  %v172 = vld [vmem:[%s3 + $0x118] sm:$0xf]
  %v173 = vld [vmem:[%s3 + $0x11c] sm:$0xf]
  %v174 = vld [vmem:[%s3 + $0x120] sm:$0xf]
  %v175 = vld [vmem:[%s3 + $0x124] sm:$0xf]
  %v176 = vld [vmem:[%s3 + $0x128] sm:$0xf]
  %v177 = vld [vmem:[%s3 + $0x12c] sm:$0xf]
  %v178 = vld [vmem:[%s3 + $0x130] sm:$0xf]
  %v179 = vld [vmem:[%s3 + $0x134] sm:$0xf]
  %v180 = vld [vmem:[%s3 + $0x138] sm:$0xf]
  %v181 = vld [vmem:[%s3 + $0x13c] sm:$0xf]
  %v182 = vld [vmem:[%s3 + $0x140] sm:$0xf]
  %v183 = vld [vmem:[%s3 + $0x144] sm:$0xf]
  %v184 = vld [vmem:[%s3 + $0x148] sm:$0xf]
  %v185 = vld [vmem:[%s3 + $0x14c] sm:$0xf]
  %v186 = vld [vmem:[%s3 + $0x150] sm:$0xf]
  %v187 = vld [vmem:[%s3 + $0x154] sm:$0xf]
  %v188 = vld [vmem:[%s3 + $0x158] sm:$0xf]
  %v189 = vld [vmem:[%s3 + $0x15c] sm:$0xf]
  %v190 = vld [vmem:[%s3 + $0x160] sm:$0xf]
  %v191 = vld [vmem:[%s3 + $0x164] sm:$0xf]
  %v192 = vld [vmem:[%s3 + $0x168] sm:$0xf]
  %v193 = vld [vmem:[%s3 + $0x16c] sm:$0xf]
  %v194 = vld [vmem:[%s3 + $0x170] sm:$0xf]
  %v195 = vld [vmem:[%s3 + $0x174] sm:$0xf]
  %v196 = vld [vmem:[%s3 + $0x178] sm:$0xf]
  %v197 = vld [vmem:[%s3 + $0x17c] sm:$0xf]
  %v198 = vld [vmem:[%s3 + $0x180] sm:$0xf]
  %v199 = vld [vmem:[%s3 + $0x184] sm:$0xf]
  %v200 = vld [vmem:[%s3 + $0x188] sm:$0xf]
  %v201 = vld [vmem:[%s3 + $0x18c] sm:$0xf]
  %v202 = vld [vmem:[%s3 + $0x190] sm:$0xf]
  %v203 = vld [vmem:[%s3 + $0x194] sm:$0xf]
  %v204 = vld [vmem:[%s3 + $0x198] sm:$0xf]
  %v205 = vld [vmem:[%s3 + $0x19c] sm:$0xf]
  %v206 = vld [vmem:[%s3 + $0x1a0] sm:$0xf]
  %v207 = vld [vmem:[%s3 + $0x1a4] sm:$0xf]
  %v208 = vld [vmem:[%s3 + $0x1a8] sm:$0xf]
  %v209 = vld [vmem:[%s3 + $0x1ac] sm:$0xf]
  %v210 = vld [vmem:[%s3 + $0x1b0] sm:$0xf]
  %v211 = vld [vmem:[%s3 + $0x1b4] sm:$0xf]
  %v212 = vld [vmem:[%s3 + $0x1b8] sm:$0xf]
  %v213 = vld [vmem:[%s3 + $0x1bc] sm:$0xf]
  %v214 = vld [vmem:[%s3 + $0x1c0] sm:$0xf]
  %v215 = vld [vmem:[%s3 + $0x1c4] sm:$0xf]
  %v216 = vld [vmem:[%s3 + $0x1c8] sm:$0xf]
  %v217 = vld [vmem:[%s3 + $0x1cc] sm:$0xf]
  %v218 = vld [vmem:[%s3 + $0x1d0] sm:$0xf]
  %v219 = vld [vmem:[%s3 + $0x1d4] sm:$0xf]
  %v220 = vld [vmem:[%s3 + $0x1d8] sm:$0xf]
  %v221 = vld [vmem:[%s3 + $0x1dc] sm:$0xf]
  %v222 = vld [vmem:[%s3 + $0x1e0] sm:$0xf]
  %v223 = vld [vmem:[%s3 + $0x1e4] sm:$0xf]
  %v224 = vld [vmem:[%s3 + $0x1e8] sm:$0xf]
  %v225 = vld [vmem:[%s3 + $0x1ec] sm:$0xf]
  %v226 = vld [vmem:[%s3 + $0x1f0] sm:$0xf]
  %v227 = vld [vmem:[%s3 + $0x1f4] sm:$0xf]
  %v228 = vld [vmem:[%s3 + $0x1f8] sm:$0xf]
  %v229 = vld [vmem:[%s3 + $0x1fc] sm:$0xf]
  %v230 = vld [vmem:[%s4] sm:$0x1]
  %v232 = vlaneseq
  %v233 = vshrl.u32 %v232, 7
  %v234 = vsub.s32 0, %v233
  %v235 = vrot.slane %v230, %v234
  %v365 = vunpack.c.l.b16 %v102
  %v366 = vunpack.c.l.b16 %v103
  %v367 = vunpack.c.l.b16 %v104
  %v368 = vunpack.c.l.b16 %v105
  %v369 = vunpack.c.l.b16 %v106
  %v370 = vunpack.c.l.b16 %v107
  %v371 = vunpack.c.l.b16 %v108
  %v372 = vunpack.c.l.b16 %v109
  %v373 = vunpack.c.l.b16 %v110
  %v374 = vunpack.c.l.b16 %v111
  %v375 = vunpack.c.l.b16 %v112
  %v376 = vunpack.c.l.b16 %v113
  %v377 = vunpack.c.l.b16 %v114
  %v378 = vunpack.c.l.b16 %v115
  %v379 = vunpack.c.l.b16 %v116
  %v380 = vunpack.c.l.b16 %v117
  %v381 = vunpack.c.l.b16 %v118
  %v382 = vunpack.c.l.b16 %v119
  %v383 = vunpack.c.l.b16 %v120
  %v384 = vunpack.c.l.b16 %v121
  %v385 = vunpack.c.l.b16 %v122
  %v386 = vunpack.c.l.b16 %v123
  %v387 = vunpack.c.l.b16 %v124
  %v388 = vunpack.c.l.b16 %v125
  %v389 = vunpack.c.l.b16 %v126
  %v390 = vunpack.c.l.b16 %v127
  %v391 = vunpack.c.l.b16 %v128
  %v392 = vunpack.c.l.b16 %v129
  %v393 = vunpack.c.l.b16 %v130
  %v394 = vunpack.c.l.b16 %v131
  %v395 = vunpack.c.l.b16 %v132
  %v396 = vunpack.c.l.b16 %v133
  %v397 = vunpack.c.l.b16 %v134
  %v398 = vunpack.c.l.b16 %v135
  %v399 = vunpack.c.l.b16 %v136
  %v400 = vunpack.c.l.b16 %v137
  %v401 = vunpack.c.l.b16 %v138
  %v402 = vunpack.c.l.b16 %v139
  %v403 = vunpack.c.l.b16 %v140
  %v404 = vunpack.c.l.b16 %v141
  %v405 = vunpack.c.l.b16 %v142
  %v406 = vunpack.c.l.b16 %v143
  %v407 = vunpack.c.l.b16 %v144
  %v408 = vunpack.c.l.b16 %v145
  %v409 = vunpack.c.l.b16 %v146
  %v410 = vunpack.c.l.b16 %v147
  %v411 = vunpack.c.l.b16 %v148
  %v412 = vunpack.c.l.b16 %v149
  %v413 = vunpack.c.l.b16 %v150
  %v414 = vunpack.c.l.b16 %v151
  %v415 = vunpack.c.l.b16 %v152
  %v416 = vunpack.c.l.b16 %v153
  %v417 = vunpack.c.l.b16 %v154
  %v418 = vunpack.c.l.b16 %v155
  %v419 = vunpack.c.l.b16 %v156
  %v420 = vunpack.c.l.b16 %v157
  %v421 = vunpack.c.l.b16 %v158
  %v422 = vunpack.c.l.b16 %v159
  %v423 = vunpack.c.l.b16 %v160
  %v424 = vunpack.c.l.b16 %v161
  %v425 = vunpack.c.l.b16 %v162
  %v426 = vunpack.c.l.b16 %v163
  %v427 = vunpack.c.l.b16 %v164
  %v428 = vunpack.c.l.b16 %v165
  %v429 = vunpack.c.l.b16 %v166
  %v430 = vunpack.c.l.b16 %v167
  %v431 = vunpack.c.l.b16 %v168
  %v432 = vunpack.c.l.b16 %v169
  %v433 = vunpack.c.l.b16 %v170
  %v434 = vunpack.c.l.b16 %v171
  %v435 = vunpack.c.l.b16 %v172
  %v436 = vunpack.c.l.b16 %v173
  %v437 = vunpack.c.l.b16 %v174
  %v438 = vunpack.c.l.b16 %v175
  %v439 = vunpack.c.l.b16 %v176
  %v440 = vunpack.c.l.b16 %v177
  %v441 = vunpack.c.l.b16 %v178
  %v442 = vunpack.c.l.b16 %v179
  %v443 = vunpack.c.l.b16 %v180
  %v444 = vunpack.c.l.b16 %v181
  %v445 = vunpack.c.l.b16 %v182
  %v446 = vunpack.c.l.b16 %v183
  %v447 = vunpack.c.l.b16 %v184
  %v448 = vunpack.c.l.b16 %v185
  %v449 = vunpack.c.l.b16 %v186
  %v450 = vunpack.c.l.b16 %v187
  %v451 = vunpack.c.l.b16 %v188
  %v452 = vunpack.c.l.b16 %v189
  %v453 = vunpack.c.l.b16 %v190
  %v454 = vunpack.c.l.b16 %v191
  %v455 = vunpack.c.l.b16 %v192
  %v456 = vunpack.c.l.b16 %v193
  %v457 = vunpack.c.l.b16 %v194
  %v458 = vunpack.c.l.b16 %v195
  %v459 = vunpack.c.l.b16 %v196
  %v460 = vunpack.c.l.b16 %v197
  %v461 = vunpack.c.l.b16 %v198
  %v462 = vunpack.c.l.b16 %v199
  %v463 = vunpack.c.l.b16 %v200
  %v464 = vunpack.c.l.b16 %v201
  %v465 = vunpack.c.l.b16 %v202
  %v466 = vunpack.c.l.b16 %v203
  %v467 = vunpack.c.l.b16 %v204
  %v468 = vunpack.c.l.b16 %v205
  %v469 = vunpack.c.l.b16 %v206
  %v470 = vunpack.c.l.b16 %v207
  %v471 = vunpack.c.l.b16 %v208
  %v472 = vunpack.c.l.b16 %v209
  %v473 = vunpack.c.l.b16 %v210
  %v474 = vunpack.c.l.b16 %v211
  %v475 = vunpack.c.l.b16 %v212
  %v476 = vunpack.c.l.b16 %v213
  %v477 = vunpack.c.l.b16 %v214
  %v478 = vunpack.c.l.b16 %v215
  %v479 = vunpack.c.l.b16 %v216
  %v480 = vunpack.c.l.b16 %v217
  %v481 = vunpack.c.l.b16 %v218
  %v482 = vunpack.c.l.b16 %v219
  %v483 = vunpack.c.l.b16 %v220
  %v484 = vunpack.c.l.b16 %v221
  %v485 = vunpack.c.l.b16 %v222
  %v486 = vunpack.c.l.b16 %v223
  %v487 = vunpack.c.l.b16 %v224
  %v488 = vunpack.c.l.b16 %v225
  %v489 = vunpack.c.l.b16 %v226
  %v490 = vunpack.c.l.b16 %v227
  %v491 = vunpack.c.l.b16 %v228
  %v492 = vunpack.c.l.b16 %v229
  %v493 = vpack.c.b16 %v366, %v365
  %v494 = vpack.c.b16 %v368, %v367
  %v495 = vpack.c.b16 %v370, %v369
  %v496 = vpack.c.b16 %v372, %v371
  %v497 = vpack.c.b16 %v374, %v373
  %v498 = vpack.c.b16 %v376, %v375
  %v499 = vpack.c.b16 %v378, %v377
  %v500 = vpack.c.b16 %v380, %v379
  %v501 = vpack.c.b16 %v382, %v381
  %v502 = vpack.c.b16 %v384, %v383
  %v503 = vpack.c.b16 %v386, %v385
  %v504 = vpack.c.b16 %v388, %v387
  %v505 = vpack.c.b16 %v390, %v389
  %v506 = vpack.c.b16 %v392, %v391
  %v507 = vpack.c.b16 %v394, %v393
  %v508 = vpack.c.b16 %v396, %v395
  %v509 = vpack.c.b16 %v398, %v397
  %v510 = vpack.c.b16 %v400, %v399
  %v511 = vpack.c.b16 %v402, %v401
  %v512 = vpack.c.b16 %v404, %v403
  %v513 = vpack.c.b16 %v406, %v405
  %v514 = vpack.c.b16 %v408, %v407
  %v515 = vpack.c.b16 %v410, %v409
  %v516 = vpack.c.b16 %v412, %v411
  %v517 = vpack.c.b16 %v414, %v413
  %v518 = vpack.c.b16 %v416, %v415
  %v519 = vpack.c.b16 %v418, %v417
  %v520 = vpack.c.b16 %v420, %v419
  %v521 = vpack.c.b16 %v422, %v421
  %v522 = vpack.c.b16 %v424, %v423
  %v523 = vpack.c.b16 %v426, %v425
  %v524 = vpack.c.b16 %v428, %v427
  %v525 = vpack.c.b16 %v430, %v429
  %v526 = vpack.c.b16 %v432, %v431
  %v527 = vpack.c.b16 %v434, %v433
  %v528 = vpack.c.b16 %v436, %v435
  %v529 = vpack.c.b16 %v438, %v437
  %v530 = vpack.c.b16 %v440, %v439
  %v531 = vpack.c.b16 %v442, %v441
  %v532 = vpack.c.b16 %v444, %v443
  %v533 = vpack.c.b16 %v446, %v445
  %v534 = vpack.c.b16 %v448, %v447
  %v535 = vpack.c.b16 %v450, %v449
  %v536 = vpack.c.b16 %v452, %v451
  %v537 = vpack.c.b16 %v454, %v453
  %v538 = vpack.c.b16 %v456, %v455
  %v539 = vpack.c.b16 %v458, %v457
  %v540 = vpack.c.b16 %v460, %v459
  %v541 = vpack.c.b16 %v462, %v461
  %v542 = vpack.c.b16 %v464, %v463
  %v543 = vpack.c.b16 %v466, %v465
  %v544 = vpack.c.b16 %v468, %v467
  %v545 = vpack.c.b16 %v470, %v469
  %v546 = vpack.c.b16 %v472, %v471
  %v547 = vpack.c.b16 %v474, %v473
  %v548 = vpack.c.b16 %v476, %v475
  %v549 = vpack.c.b16 %v478, %v477
  %v550 = vpack.c.b16 %v480, %v479
  %v551 = vpack.c.b16 %v482, %v481
  %v552 = vpack.c.b16 %v484, %v483
  %v553 = vpack.c.b16 %v486, %v485
  %v554 = vpack.c.b16 %v488, %v487
  %v555 = vpack.c.b16 %v490, %v489
  %v556 = vpack.c.b16 %v492, %v491
  %621 = vmatprep.subr.bf16.mxu0 0
  %622 = vmatpush1.bf16.msra.mxu0 %v493
  %623 = vmatprep.subr.bf16.mxu0 0
  %624 = vmatpush1.bf16.msra.mxu0 %v494
  %625 = vmatprep.subr.bf16.mxu0 0
  %626 = vmatpush1.bf16.msra.mxu0 %v495
  %627 = vmatprep.subr.bf16.mxu0 0
  %628 = vmatpush1.bf16.msra.mxu0 %v496
  %629 = vmatprep.subr.bf16.mxu0 0
  %630 = vmatpush1.bf16.msra.mxu0 %v497
  %631 = vmatprep.subr.bf16.mxu0 0
  %632 = vmatpush1.bf16.msra.mxu0 %v498
  %633 = vmatprep.subr.bf16.mxu0 0
  %634 = vmatpush1.bf16.msra.mxu0 %v499
  %635 = vmatprep.subr.bf16.mxu0 0
  %636 = vmatpush1.bf16.msra.mxu0 %v500
  %637 = vmatprep.subr.bf16.mxu0 0
  %638 = vmatpush1.bf16.msra.mxu0 %v501
  %639 = vmatprep.subr.bf16.mxu0 0
  %640 = vmatpush1.bf16.msra.mxu0 %v502
  %641 = vmatprep.subr.bf16.mxu0 0
  %642 = vmatpush1.bf16.msra.mxu0 %v503
  %643 = vmatprep.subr.bf16.mxu0 0
  %644 = vmatpush1.bf16.msra.mxu0 %v504
  %645 = vmatprep.subr.bf16.mxu0 0
  %646 = vmatpush1.bf16.msra.mxu0 %v505
  %647 = vmatprep.subr.bf16.mxu0 0
  %648 = vmatpush1.bf16.msra.mxu0 %v506
  %649 = vmatprep.subr.bf16.mxu0 0
  %650 = vmatpush1.bf16.msra.mxu0 %v507
  %651 = vmatprep.subr.bf16.mxu0 0
  %652 = vmatpush1.bf16.msra.mxu0 %v508
  %653 = vmatprep.mubr.bf16.mxu0 %v79
  %654 = vmatmul.mubr.bf16.gmra.mrb[0].mxu0 %v78
  %v655 = vpop.f32.mrb[0].mxu0
  %v656 = vadd.f32 %v235, %v655
  %v657 = vpop.f32.mrb[0].mxu0
  %v658 = vpop.f32.mrb[0].mxu0
  %v659 = vadd.f32 %v235, %v658
  %v660 = vpop.f32.mrb[0].mxu0
  %661 = vmatprep.mubr.bf16.mxu0 %v87
  %662 = vmatmul.mubr.bf16.gmra.mrb[0].mxu0 %v86
  %v663 = vpop.f32.mrb[0].mxu0
  %v664 = vadd.f32 %v235, %v663
  %v665 = vpop.f32.mrb[0].mxu0
  %v666 = vpop.f32.mrb[0].mxu0
  %v667 = vadd.f32 %v235, %v666
  %v668 = vpop.f32.mrb[0].mxu0
  %669 = vmatprep.mubr.bf16.mxu0 %v95
  %670 = vmatmul.mubr.bf16.gmra.mrb[0].mxu0 %v94
  %v671 = vpop.f32.mrb[0].mxu0
  %v672 = vadd.f32 %v235, %v671
  %v673 = vpop.f32.mrb[0].mxu0
  %v674 = vpop.f32.mrb[0].mxu0
  %v675 = vadd.f32 %v235, %v674
  %v676 = vpop.f32.mrb[0].mxu0
  %677 = vdwg.mxu0
  %678 = vmatprep.subr.bf16.mxu0 0
  %679 = vmatpush1.bf16.msra.mxu0 %v509
  %680 = vmatprep.subr.bf16.mxu0 0
  %681 = vmatpush1.bf16.msra.mxu0 %v510
  %682 = vmatprep.subr.bf16.mxu0 0
  %683 = vmatpush1.bf16.msra.mxu0 %v511
  %684 = vmatprep.subr.bf16.mxu0 0
  %685 = vmatpush1.bf16.msra.mxu0 %v512
  %686 = vmatprep.subr.bf16.mxu0 0
  %687 = vmatpush1.bf16.msra.mxu0 %v513
  %688 = vmatprep.subr.bf16.mxu0 0
  %689 = vmatpush1.bf16.msra.mxu0 %v514
  %690 = vmatprep.subr.bf16.mxu0 0
  %691 = vmatpush1.bf16.msra.mxu0 %v515
  %692 = vmatprep.subr.bf16.mxu0 0
  %693 = vmatpush1.bf16.msra.mxu0 %v516
  %694 = vmatprep.subr.bf16.mxu0 0
  %695 = vmatpush1.bf16.msra.mxu0 %v517
  %696 = vmatprep.subr.bf16.mxu0 0
  %697 = vmatpush1.bf16.msra.mxu0 %v518
  %698 = vmatprep.subr.bf16.mxu0 0
  %699 = vmatpush1.bf16.msra.mxu0 %v519
  %700 = vmatprep.subr.bf16.mxu0 0
  %701 = vmatpush1.bf16.msra.mxu0 %v520
  %702 = vmatprep.subr.bf16.mxu0 0
  %703 = vmatpush1.bf16.msra.mxu0 %v521
  %704 = vmatprep.subr.bf16.mxu0 0
  %705 = vmatpush1.bf16.msra.mxu0 %v522
  %706 = vmatprep.subr.bf16.mxu0 0
  %707 = vmatpush1.bf16.msra.mxu0 %v523
  %708 = vmatprep.subr.bf16.mxu0 0
  %709 = vmatpush1.bf16.msra.mxu0 %v524
  %710 = vmatprep.mubr.bf16.mxu0 %v81
  %711 = vmatmul.mubr.bf16.gmra.mrb[0].mxu0 %v80
  %v712 = vpop.f32.mrb[0].mxu0
  %v713 = vadd.f32 %v656, %v712
  %v714 = vpop.f32.mrb[0].mxu0
  %v715 = vpop.f32.mrb[0].mxu0
  %v716 = vadd.f32 %v659, %v715
  %v717 = vpop.f32.mrb[0].mxu0
  %718 = vmatprep.mubr.bf16.mxu0 %v89
  %719 = vmatmul.mubr.bf16.gmra.mrb[0].mxu0 %v88
  %v720 = vpop.f32.mrb[0].mxu0
  %v721 = vadd.f32 %v664, %v720
  %v722 = vpop.f32.mrb[0].mxu0
  %v723 = vpop.f32.mrb[0].mxu0
  %v724 = vadd.f32 %v667, %v723
  %v725 = vpop.f32.mrb[0].mxu0
  %726 = vmatprep.mubr.bf16.mxu0 %v97
  %727 = vmatmul.mubr.bf16.gmra.mrb[0].mxu0 %v96
  %v728 = vpop.f32.mrb[0].mxu0
  %v729 = vadd.f32 %v672, %v728
  %v730 = vpop.f32.mrb[0].mxu0
  %v731 = vpop.f32.mrb[0].mxu0
  %v732 = vadd.f32 %v675, %v731
  %v733 = vpop.f32.mrb[0].mxu0
  %734 = vdwg.mxu0
  %735 = vmatprep.subr.bf16.mxu0 0
  %736 = vmatpush1.bf16.msra.mxu0 %v525
  %737 = vmatprep.subr.bf16.mxu0 0
  %738 = vmatpush1.bf16.msra.mxu0 %v526
  %739 = vmatprep.subr.bf16.mxu0 0
  %740 = vmatpush1.bf16.msra.mxu0 %v527
  %741 = vmatprep.subr.bf16.mxu0 0
  %742 = vmatpush1.bf16.msra.mxu0 %v528
  %743 = vmatprep.subr.bf16.mxu0 0
  %744 = vmatpush1.bf16.msra.mxu0 %v529
  %745 = vmatprep.subr.bf16.mxu0 0
  %746 = vmatpush1.bf16.msra.mxu0 %v530
  %747 = vmatprep.subr.bf16.mxu0 0
  %748 = vmatpush1.bf16.msra.mxu0 %v531
  %749 = vmatprep.subr.bf16.mxu0 0
  %750 = vmatpush1.bf16.msra.mxu0 %v532
  %751 = vmatprep.subr.bf16.mxu0 0
  %752 = vmatpush1.bf16.msra.mxu0 %v533
  %753 = vmatprep.subr.bf16.mxu0 0
  %754 = vmatpush1.bf16.msra.mxu0 %v534
  %755 = vmatprep.subr.bf16.mxu0 0
  %756 = vmatpush1.bf16.msra.mxu0 %v535
  %757 = vmatprep.subr.bf16.mxu0 0
  %758 = vmatpush1.bf16.msra.mxu0 %v536
  %759 = vmatprep.subr.bf16.mxu0 0
  %760 = vmatpush1.bf16.msra.mxu0 %v537
  %761 = vmatprep.subr.bf16.mxu0 0
  %762 = vmatpush1.bf16.msra.mxu0 %v538
  %763 = vmatprep.subr.bf16.mxu0 0
  %764 = vmatpush1.bf16.msra.mxu0 %v539
  %765 = vmatprep.subr.bf16.mxu0 0
  %766 = vmatpush1.bf16.msra.mxu0 %v540
  %767 = vmatprep.mubr.bf16.mxu0 %v83
  %768 = vmatmul.mubr.bf16.gmra.mrb[0].mxu0 %v82
  %v769 = vpop.f32.mrb[0].mxu0
  %v770 = vadd.f32 %v713, %v769
  %v771 = vpop.f32.mrb[0].mxu0
  %v772 = vpop.f32.mrb[0].mxu0
  %v773 = vadd.f32 %v716, %v772
  %v774 = vpop.f32.mrb[0].mxu0
  %775 = vmatprep.mubr.bf16.mxu0 %v91
  %776 = vmatmul.mubr.bf16.gmra.mrb[0].mxu0 %v90
  %v777 = vpop.f32.mrb[0].mxu0
  %v778 = vadd.f32 %v721, %v777
  %v779 = vpop.f32.mrb[0].mxu0
  %v780 = vpop.f32.mrb[0].mxu0
  %v781 = vadd.f32 %v724, %v780
  %v782 = vpop.f32.mrb[0].mxu0
  %783 = vmatprep.mubr.bf16.mxu0 %v99
  %784 = vmatmul.mubr.bf16.gmra.mrb[0].mxu0 %v98
  %v785 = vpop.f32.mrb[0].mxu0
  %v786 = vadd.f32 %v729, %v785
  %v787 = vpop.f32.mrb[0].mxu0
  %v788 = vpop.f32.mrb[0].mxu0
  %v789 = vadd.f32 %v732, %v788
  %v790 = vpop.f32.mrb[0].mxu0
  %791 = vdwg.mxu0
  %792 = vmatprep.subr.bf16.mxu0 0
  %793 = vmatpush1.bf16.msra.mxu0 %v541
  %794 = vmatprep.subr.bf16.mxu0 0
  %795 = vmatpush1.bf16.msra.mxu0 %v542
  %796 = vmatprep.subr.bf16.mxu0 0
  %797 = vmatpush1.bf16.msra.mxu0 %v543
  %798 = vmatprep.subr.bf16.mxu0 0
  %799 = vmatpush1.bf16.msra.mxu0 %v544
  %800 = vmatprep.subr.bf16.mxu0 0
  %801 = vmatpush1.bf16.msra.mxu0 %v545
  %802 = vmatprep.subr.bf16.mxu0 0
  %803 = vmatpush1.bf16.msra.mxu0 %v546
  %804 = vmatprep.subr.bf16.mxu0 0
  %805 = vmatpush1.bf16.msra.mxu0 %v547
  %806 = vmatprep.subr.bf16.mxu0 0
  %807 = vmatpush1.bf16.msra.mxu0 %v548
  %808 = vmatprep.subr.bf16.mxu0 0
  %809 = vmatpush1.bf16.msra.mxu0 %v549
  %810 = vmatprep.subr.bf16.mxu0 0
  %811 = vmatpush1.bf16.msra.mxu0 %v550
  %812 = vmatprep.subr.bf16.mxu0 0
  %813 = vmatpush1.bf16.msra.mxu0 %v551
  %814 = vmatprep.subr.bf16.mxu0 0
  %815 = vmatpush1.bf16.msra.mxu0 %v552
  %816 = vmatprep.subr.bf16.mxu0 0
  %817 = vmatpush1.bf16.msra.mxu0 %v553
  %818 = vmatprep.subr.bf16.mxu0 0
  %819 = vmatpush1.bf16.msra.mxu0 %v554
  %820 = vmatprep.subr.bf16.mxu0 0
  %821 = vmatpush1.bf16.msra.mxu0 %v555
  %822 = vmatprep.subr.bf16.mxu0 0
  %823 = vmatpush1.bf16.msra.mxu0 %v556
  %824 = vmatprep.mubr.bf16.mxu0 %v85
  %825 = vmatmul.mubr.bf16.gmra.mrb[0].mxu0 %v84
  %v826 = vpop.f32.mrb[0].mxu0
  %v827 = vadd.f32 %v770, %v826
  %v828 = vpop.f32.mrb[0].mxu0
  %v829 = vpop.f32.mrb[0].mxu0
  %v830 = vadd.f32 %v773, %v829
  %v831 = vpop.f32.mrb[0].mxu0
  %832 = vmatprep.mubr.bf16.mxu0 %v93
  %833 = vmatmul.mubr.bf16.gmra.mrb[0].mxu0 %v92
  %v834 = vpop.f32.mrb[0].mxu0
  %v835 = vadd.f32 %v778, %v834
  %v836 = vpop.f32.mrb[0].mxu0
  %v837 = vpop.f32.mrb[0].mxu0
  %v838 = vadd.f32 %v781, %v837
  %v839 = vpop.f32.mrb[0].mxu0
  %840 = vmatprep.mubr.bf16.mxu0 %v101
  %841 = vmatmul.mubr.bf16.gmra.mrb[0].mxu0 %v100
  %v842 = vpop.f32.mrb[0].mxu0
  %v843 = vadd.f32 %v786, %v842
  %v844 = vpop.f32.mrb[0].mxu0
  %v845 = vpop.f32.mrb[0].mxu0
  %v846 = vadd.f32 %v789, %v845
  %v847 = vpop.f32.mrb[0].mxu0
  %848 = vdwg.mxu0
  %v849 = vmax.f32 %v827, 0.0
  %v850 = vmax.f32 %v830, 0.0
  %v851 = vmax.f32 %v835, 0.0
  %v852 = vmax.f32 %v838, 0.0
  %v853 = vmax.f32 %v843, 0.0
  %v854 = vmax.f32 %v846, 0.0
  %v855 = vpack.c.bf16 %v850, %v849
  %v856 = vpack.c.bf16 %v852, %v851
  %v857 = vpack.c.bf16 %v854, %v853
  %v858 = vld [vmem:[%s5] sm:$0xf]
  %v859 = vld [vmem:[%s5 + $0x4] sm:$0xf]
  %v860 = vld [vmem:[%s5 + $0x8] sm:$0xf]
  %v861 = vld [vmem:[%s5 + $0xc] sm:$0xf]
  %v862 = vld [vmem:[%s5 + $0x10] sm:$0xf]
  %v863 = vld [vmem:[%s5 + $0x14] sm:$0xf]
  %v864 = vld [vmem:[%s5 + $0x18] sm:$0xf]
  %v865 = vld [vmem:[%s5 + $0x1c] sm:$0xf]
  %v866 = vld [vmem:[%s5 + $0x20] sm:$0xf]
  %v867 = vld [vmem:[%s5 + $0x24] sm:$0xf]
  %v868 = vld [vmem:[%s5 + $0x28] sm:$0xf]
  %v869 = vld [vmem:[%s5 + $0x2c] sm:$0xf]
  %v870 = vld [vmem:[%s5 + $0x30] sm:$0xf]
  %v871 = vld [vmem:[%s5 + $0x34] sm:$0xf]
  %v872 = vld [vmem:[%s5 + $0x38] sm:$0xf]
  %v873 = vld [vmem:[%s5 + $0x3c] sm:$0xf]
  %v874 = vld [vmem:[%s6] sm:$0x1]
  %v876 = vlaneseq
  %v877 = vshrl.u32 %v876, 7
  %v878 = vsub.s32 0, %v877
  %v879 = vrot.slane %v874, %v878
  %v897 = vunpack.c.l.b16 %v858
  %v898 = vunpack.c.l.b16 %v859
  %v899 = vunpack.c.l.b16 %v860
  %v900 = vunpack.c.l.b16 %v861
  %v901 = vunpack.c.l.b16 %v862
  %v902 = vunpack.c.l.b16 %v863
  %v903 = vunpack.c.l.b16 %v864
  %v904 = vunpack.c.l.b16 %v865
  %v905 = vunpack.c.l.b16 %v866
  %v906 = vunpack.c.l.b16 %v867
  %v907 = vunpack.c.l.b16 %v868
  %v908 = vunpack.c.l.b16 %v869
  %v909 = vunpack.c.l.b16 %v870
  %v910 = vunpack.c.l.b16 %v871
  %v911 = vunpack.c.l.b16 %v872
  %v912 = vunpack.c.l.b16 %v873
  %v913 = vpack.c.b16 %v898, %v897
  %v914 = vpack.c.b16 %v900, %v899
  %v915 = vpack.c.b16 %v902, %v901
  %v916 = vpack.c.b16 %v904, %v903
  %v917 = vpack.c.b16 %v906, %v905
  %v918 = vpack.c.b16 %v908, %v907
  %v919 = vpack.c.b16 %v910, %v909
  %v920 = vpack.c.b16 %v912, %v911
  %929 = vmatprep.subr.bf16.mxu0 0
  %930 = vmatpush1.bf16.msra.mxu0 %v913
  %931 = vmatprep.subr.bf16.mxu0 0
  %932 = vmatpush1.bf16.msra.mxu0 %v914
  %933 = vmatprep.subr.bf16.mxu0 0
  %934 = vmatpush1.bf16.msra.mxu0 %v915
  %935 = vmatprep.subr.bf16.mxu0 0
  %936 = vmatpush1.bf16.msra.mxu0 %v916
  %937 = vmatprep.subr.bf16.mxu0 0
  %938 = vmatpush1.bf16.msra.mxu0 %v917
  %939 = vmatprep.subr.bf16.mxu0 0
  %940 = vmatpush1.bf16.msra.mxu0 %v918
  %941 = vmatprep.subr.bf16.mxu0 0
  %942 = vmatpush1.bf16.msra.mxu0 %v919
  %943 = vmatprep.subr.bf16.mxu0 0
  %944 = vmatpush1.bf16.msra.mxu0 %v920
  %945 = vmatprep.subr.bf16.mxu0 0
  %946 = vmatpush1.bf16.msra.mxu0 0
  %947 = vmatprep.subr.bf16.mxu0 0
  %948 = vmatpush1.bf16.msra.mxu0 0
  %949 = vmatprep.subr.bf16.mxu0 0
  %950 = vmatpush1.bf16.msra.mxu0 0
  %951 = vmatprep.subr.bf16.mxu0 0
  %952 = vmatpush1.bf16.msra.mxu0 0
  %953 = vmatprep.subr.bf16.mxu0 0
  %954 = vmatpush1.bf16.msra.mxu0 0
  %955 = vmatprep.subr.bf16.mxu0 0
  %956 = vmatpush1.bf16.msra.mxu0 0
  %957 = vmatprep.subr.bf16.mxu0 0
  %958 = vmatpush1.bf16.msra.mxu0 0
  %959 = vmatprep.subr.bf16.mxu0 0
  %960 = vmatpush1.bf16.msra.mxu0 0
  %961 = vmatprep.mubr.bf16.mxu0 0
  %962 = vmatmul.mubr.bf16.gmra.mrb[0].mxu0 %v855
  %v963 = vpop.f32.mrb[0].mxu0
  %v964 = vadd.f32 %v879, %v963
  %v965 = vpop.f32.mrb[0].mxu0
  %v966 = vpop.f32.mrb[0].mxu0
  %v967 = vadd.f32 %v879, %v966
  %v968 = vpop.f32.mrb[0].mxu0
  %969 = vmatprep.mubr.bf16.mxu0 0
  %970 = vmatmul.mubr.bf16.gmra.mrb[0].mxu0 %v856
  %v971 = vpop.f32.mrb[0].mxu0
  %v972 = vadd.f32 %v879, %v971
  %v973 = vpop.f32.mrb[0].mxu0
  %v974 = vpop.f32.mrb[0].mxu0
  %v975 = vadd.f32 %v879, %v974
  %v976 = vpop.f32.mrb[0].mxu0
  %977 = vmatprep.mubr.bf16.mxu0 0
  %978 = vmatmul.mubr.bf16.gmra.mrb[0].mxu0 %v857
  %v979 = vpop.f32.mrb[0].mxu0
  %v980 = vadd.f32 %v879, %v979
  %v981 = vpop.f32.mrb[0].mxu0
  %v982 = vpop.f32.mrb[0].mxu0
  %v983 = vadd.f32 %v879, %v982
  %v984 = vpop.f32.mrb[0].mxu0
  %985 = vdwg.mxu0
  %986 = vst [vmem:[%s7] sm:$0xff] %v964
  %987 = vst [vmem:[%s7 + $0x8] sm:$0xff] %v967
  %988 = vst [vmem:[%s8] sm:$0xff] %v972
  %989 = vst [vmem:[%s8 + $0x8] sm:$0xff] %v975
  %990 = vst [vmem:[%s9] sm:$0xff] %v980
  %991 = vst [vmem:[%s9 + $0x8] sm:$0xff] %v983
  // Predicated region
  $region30: #{triplet_net_forward.1} parent=0 // pred_check
    _
  $region31: #{triplet_net_forward.1} parent=0 // pred_check_branch
    %993 = sbr.rel (0) target = $region33
  $region32: #{triplet_net_forward.1} parent=0 // pred_region
    _
  $region33: #{triplet_net_forward.1} parent=0 // pred_fallthru
    _
  // Predicated region
  $region34: #{triplet_net_forward.1} parent=0 // pred_check
    _
  $region35: #{triplet_net_forward.1} parent=0 // pred_check_branch
    %995 = sbr.rel (0) target = $region37
  $region36: #{triplet_net_forward.1} parent=0 // pred_region
    _
  $region37: #{triplet_net_forward.1} parent=0 // pred_fallthru
    _
  // Predicated region
  $region38: #{triplet_net_forward.1} parent=0 // pred_check
    _
  $region39: #{triplet_net_forward.1} parent=0 // pred_check_branch
    %997 = sbr.rel (0) target = $region41
  $region40: #{triplet_net_forward.1} parent=0 // pred_region
    _
  $region41: #{triplet_net_forward.1} parent=0 // pred_fallthru
    _
  // Predicated region
  $region42: #{triplet_net_forward.1} parent=0 // pred_check
    _
  $region43: #{triplet_net_forward.1} parent=0 // pred_check_branch
    %999 = sbr.rel (0) target = $region45
  $region44: #{triplet_net_forward.1} parent=0 // pred_region
    _
  $region45: #{triplet_net_forward.1} parent=0 // pred_fallthru
    _
  // Predicated region
  $region46: #{triplet_net_forward.1} parent=0 // pred_check
    _
  $region47: #{triplet_net_forward.1} parent=0 // pred_check_branch
    %1001 = sbr.rel (0) target = $region49
  $region48: #{triplet_net_forward.1} parent=0 // pred_region
    _
  $region49: #{triplet_net_forward.1} parent=0 // pred_fallthru
    _
  // Predicated region
  $region50: #{triplet_net_forward.1} parent=0 // pred_check
    _
  $region51: #{triplet_net_forward.1} parent=0 // pred_check_branch
    %1003 = sbr.rel (0) target = $region53
  $region52: #{triplet_net_forward.1} parent=0 // pred_region
    _
  $region53: #{triplet_net_forward.1} parent=0 // pred_fallthru
    _

</llo_original>
